<compile_context>
chip_gen: v5e
topology: v5e:2x2
jax: 0.10.0
libtpu: 0.0.40
codegen_flags: <defaults>
</compile_context>

<pallas_src>
import functools

import jax
import jax.numpy as jnp
from jax import lax
from jax.experimental import pallas as pl
from jax.experimental.pallas import tpu as pltpu


# ---------------------------------------------------------------------------
# Helpers
# ---------------------------------------------------------------------------
def _round_up(x, m):
    return ((x + m - 1) // m) * m


def _pad2(a, rows, cols):
    pr, pc = rows - a.shape[0], cols - a.shape[1]
    if pr or pc:
        a = jnp.pad(a, ((0, pr), (0, pc)))
    return a


# ---------------------------------------------------------------------------
# Kernel 1: build W_eff tiles (runs once per forward, tiled over (OUT, IN))
# ---------------------------------------------------------------------------
def _weff_kernel(w_ref, ma_ref, mb_ref, la_ref, lb_ref, o_ref, *,
                 has_scaling, has_rank, scaling_is_one):
    w = w_ref[...].astype(jnp.float32)
    if has_scaling:
        if scaling_is_one:
            # (tn, 1) * (1, tk) outer product via VPU broadcast.
            scale = mb_ref[...] * ma_ref[...]
        else:
            scale = jnp.dot(mb_ref[...], ma_ref[...],
                            preferred_element_type=jnp.float32)
        w = w * scale
    if has_rank:
        w = w + jnp.dot(lb_ref[...], la_ref[...],
                        preferred_element_type=jnp.float32)
    o_ref[...] = w.astype(o_ref.dtype)


def _build_w_eff(weight, multi_lora_a, multi_lora_b, lora_a, lora_b, *,
                 scaling_rank, rank, out_p, in_p, tn, tk, out_dtype):
    """Return padded (out_p, in_p) effective weight in `out_dtype`."""
    w_p = _pad2(weight.astype(jnp.float32), out_p, in_p)
    if not scaling_rank and not rank:
        return w_p.astype(out_dtype)

    if scaling_rank:
        # Fold 1/scaling_rank into ma (O(scaling_rank * IN) instead of O(OUT*IN)).
        ma = _pad2((multi_lora_a / float(scaling_rank)).astype(jnp.float32),
                   multi_lora_a.shape[0], in_p)
        mb = _pad2(multi_lora_b.astype(jnp.float32), out_p,
                   multi_lora_b.shape[1])
    else:
        ma = jnp.zeros((1, in_p), jnp.float32)
        mb = jnp.zeros((out_p, 1), jnp.float32)

    if rank:
        # Fold 1/rank into la.
        la = _pad2((lora_a / float(rank)).astype(jnp.float32),
                   lora_a.shape[0], in_p)
        lb = _pad2(lora_b.astype(jnp.float32), out_p, lora_b.shape[1])
    else:
        la = jnp.zeros((1, in_p), jnp.float32)
        lb = jnp.zeros((out_p, 1), jnp.float32)

    sr = ma.shape[0]
    r = la.shape[0]

    kernel = functools.partial(_weff_kernel,
                               has_scaling=bool(scaling_rank),
                               has_rank=bool(rank),
                               scaling_is_one=(scaling_rank == 1))

    return pl.pallas_call(
        kernel,
        out_shape=jax.ShapeDtypeStruct((out_p, in_p), out_dtype),
        grid_spec=pltpu.PrefetchScalarGridSpec(
            num_scalar_prefetch=0,
            grid=(out_p // tn, in_p // tk),
            in_specs=[
                pl.BlockSpec((tn, tk), lambda i, j: (i, j)),   # weight tile
                pl.BlockSpec((sr, tk), lambda i, j: (0, j)),   # multi_lora_a (pre-scaled)
                pl.BlockSpec((tn, sr), lambda i, j: (i, 0)),   # multi_lora_b
                pl.BlockSpec((r, tk), lambda i, j: (0, j)),    # lora_a (pre-scaled)
                pl.BlockSpec((tn, r), lambda i, j: (i, 0)),    # lora_b
            ],
            out_specs=pl.BlockSpec((tn, tk), lambda i, j: (i, j)),
        ),
        compiler_params=pltpu.CompilerParams(
            dimension_semantics=("parallel", "parallel"),
            vmem_limit_bytes=32 * 1024 * 1024,
        ),
    )(w_p, ma, mb, la, lb)


# ---------------------------------------------------------------------------
# Kernel 2: tiled GEMM + bias  (y = x @ W_eff.T + b), f32 accumulation
# ---------------------------------------------------------------------------
def _matmul_bias_kernel(x_ref, w_ref, b_ref, o_ref, acc_ref):
    @pl.when(pl.program_id(2) == 0)
    def _():
        acc_ref[...] = jnp.zeros_like(acc_ref)

    # Contract over IN without materializing a transposed weight copy:
    # x (tm, tk) . w (tn, tk) -> (tm, tn)
    acc_ref[...] += lax.dot_general(
        x_ref[...], w_ref[...],
        dimension_numbers=(((1,), (1,)), ((), ())),
        preferred_element_type=jnp.float32)

    @pl.when(pl.program_id(2) == pl.num_programs(2) - 1)
    def _():
        o_ref[...] = (acc_ref[...] + b_ref[...]).astype(o_ref.dtype)


def _linear_pallas(x2, w_eff, bias2, *, tm, tn, tk):
    m_p, in_p = x2.shape
    out_p = w_eff.shape[0]
    grid = (m_p // tm, out_p // tn, in_p // tk)
    return pl.pallas_call(
        _matmul_bias_kernel,
        out_shape=jax.ShapeDtypeStruct((m_p, out_p), jnp.float32),
        grid_spec=pltpu.PrefetchScalarGridSpec(
            num_scalar_prefetch=0,
            grid=grid,
            in_specs=[
                pl.BlockSpec((tm, tk), lambda i, j, k: (i, k)),   # x tile
                pl.BlockSpec((tn, tk), lambda i, j, k: (j, k)),   # W_eff tile
                pl.BlockSpec((1, tn), lambda i, j, k: (0, j)),    # bias tile
            ],
            out_specs=pl.BlockSpec((tm, tn), lambda i, j, k: (i, j)),
            scratch_shapes=[pltpu.VMEM((tm, tn), jnp.float32)],
        ),
        compiler_params=pltpu.CompilerParams(
            dimension_semantics=("parallel", "parallel", "arbitrary"),
            vmem_limit_bytes=32 * 1024 * 1024,
        ),
    )(x2, w_eff, bias2)


# ---------------------------------------------------------------------------
# Wrappers
# ---------------------------------------------------------------------------
def lora_linear_forward(x, weight, bias, lora_a, lora_b, multi_lora_a,
                        multi_lora_b, *, rank, scaling_rank,
                        tm=256, tn=512, tk=1024,
                        compute_dtype=jnp.bfloat16):
    """LoRALinear.forward, general (`else`) branch.

    x:            (B, S, in_features) float32
    weight:       (out_features, in_features)
    bias:         (out_features,) or None
    lora_a:       (rank, in_features)            (ignored if rank == 0)
    lora_b:       (out_features, rank)           (ignored if rank == 0)
    multi_lora_a: (scaling_rank, in_features)    (ignored if scaling_rank == 0)
    multi_lora_b: (out_features, scaling_rank)   (ignored if scaling_rank == 0)
    returns:      (B, S, out_features) float32
    """
    B, S, IN = x.shape
    OUT = weight.shape[0]
    M = B * S

    if bias is None:
        bias = jnp.zeros((OUT,), jnp.float32)

    # Clamp tile sizes to the (padded) problem while keeping (8, 128) alignment.
    tm = min(tm, _round_up(M, 8))
    tn = min(tn, _round_up(OUT, 128))
    tk = min(tk, _round_up(IN, 128))
    m_p = _round_up(M, tm)
    out_p = _round_up(OUT, tn)
    in_p = _round_up(IN, tk)

    # Build the effective weight once (tiled Pallas kernel), in compute dtype.
    w_eff = _build_w_eff(weight, multi_lora_a, multi_lora_b, lora_a, lora_b,
                         scaling_rank=scaling_rank, rank=rank,
                         out_p=out_p, in_p=in_p, tn=tn, tk=tk,
                         out_dtype=compute_dtype)

    x2 = _pad2(x.reshape(M, IN), m_p, in_p).astype(compute_dtype)
    bias2 = _pad2(bias.astype(jnp.float32).reshape(1, OUT), 1, out_p)

    out2 = _linear_pallas(x2, w_eff, bias2, tm=tm, tn=tn, tk=tk)
    return out2[:M, :OUT].reshape(B, S, OUT)


def lora_linear_forward_scaling1(x, weight, bias, multi_lora_a, multi_lora_b,
                                 *, apply_multi_lora_a=True,
                                 apply_multi_lora_b=True,
                                 tm=256, tn=512, tk=1024,
                                 compute_dtype=jnp.bfloat16):
    """LoRALinear.forward fast path (scaling_rank == 1 and rank == 0).

    `apply_multi_lora_a` / `apply_multi_lora_b` stand in for the torch
    `requires_grad` checks (True == training mode, the factor is applied).
    Note: this path scales the bias by multi_lora_b, matching torch:
      y = (x * ma) @ W.T + b, then y *= mb   ==   x @ (W * (mb ⊗ ma)).T + b * mb
    """
    B, S, IN = x.shape
    OUT = weight.shape[0]
    if bias is None:
        bias = jnp.zeros((OUT,), jnp.float32)

    ma = (multi_lora_a.reshape(1, IN) if apply_multi_lora_a
          else jnp.ones((1, IN), jnp.float32))
    mb = (multi_lora_b.reshape(OUT, 1) if apply_multi_lora_b
          else jnp.ones((OUT, 1), jnp.float32))
    bias_eff = bias * mb.reshape(-1) if apply_multi_lora_b else bias

    return lora_linear_forward(
        x, weight, bias_eff, None, None, ma, mb,
        rank=0, scaling_rank=1, tm=tm, tn=tn, tk=tk,
        compute_dtype=compute_dtype)


# ---------------------------------------------------------------------------
# Reference (plain JAX) for verification
# ---------------------------------------------------------------------------
def lora_linear_ref(x, weight, bias, lora_a, lora_b, multi_lora_a,
                    multi_lora_b, *, rank, scaling_rank):
    w = weight
    if scaling_rank:
        w = w * (multi_lora_b @ multi_lora_a) / scaling_rank
    if rank:
        w = w + (lora_b @ lora_a) / rank
    return jnp.einsum("bsi,oi->bso", x, w) + bias


# ---------------------------------------------------------------------------
# Test
# ---------------------------------------------------------------------------
if __name__ == "__main__":
    # Small shapes consistent with the module: Linear(in=256, out=256) wrapped
    # with LoRA rank=4, scaling_rank=1, init_scale=0.01 (positive).
    B, S, IN, OUT = 2, 8, 256, 256
    RANK, SCALING_RANK = 4, 1
    INIT_SCALE = 0.01

    key = jax.random.PRNGKey(0)
    kx, kw, kb, kla, kma = jax.random.split(key, 5)

    x = jax.random.normal(kx, (B, S, IN), dtype=jnp.float32)
    weight = jax.random.normal(kw, (OUT, IN), dtype=jnp.float32) * 0.05
    bias = jax.random.normal(kb, (OUT,), dtype=jnp.float32) * 0.05

    # LoRA params matching __init__ with init_scale > 0:
    lora_a = jax.random.normal(kla, (RANK, IN), dtype=jnp.float32) * INIT_SCALE
    lora_b = jnp.zeros((OUT, RANK), dtype=jnp.float32)
    multi_lora_a = (jnp.ones((SCALING_RANK, IN), dtype=jnp.float32)
                    + jax.random.normal(kma, (SCALING_RANK, IN),
                                        dtype=jnp.float32) * INIT_SCALE)
    multi_lora_b = jnp.ones((OUT, SCALING_RANK), dtype=jnp.float32)

    ref = lora_linear_ref(x, weight, bias, lora_a, lora_b, multi_lora_a,
                          multi_lora_b, rank=RANK, scaling_rank=SCALING_RANK)

    # General branch, bf16 compute (default).
    out = jax.block_until_ready(lora_linear_forward(
        x, weight, bias, lora_a, lora_b, multi_lora_a, multi_lora_b,
        rank=RANK, scaling_rank=SCALING_RANK))
    assert out.shape == (B, S, OUT)
    assert jnp.allclose(out, ref, atol=3e-2, rtol=3e-2), "bf16 general mismatch"

    # General branch, f32 compute (tight check).
    out_f32 = jax.block_until_ready(lora_linear_forward(
        x, weight, bias, lora_a, lora_b, multi_lora_a, multi_lora_b,
        rank=RANK, scaling_rank=SCALING_RANK, compute_dtype=jnp.float32))
    assert jnp.allclose(out_f32, ref, atol=1e-3, rtol=1e-3), "f32 general mismatch"

    # Exercise a non-zero lora_b (as with init_scale < 0) so the rank term is real.
    lora_b_neg = jax.random.normal(kb, (OUT, RANK), dtype=jnp.float32) * INIT_SCALE
    ref_neg = lora_linear_ref(x, weight, bias, lora_a, lora_b_neg, multi_lora_a,
                              multi_lora_b, rank=RANK, scaling_rank=SCALING_RANK)
    out_neg = jax.block_until_ready(lora_linear_forward(
        x, weight, bias, lora_a, lora_b_neg, multi_lora_a, multi_lora_b,
        rank=RANK, scaling_rank=SCALING_RANK))
    assert jnp.allclose(out_neg, ref_neg, atol=3e-2, rtol=3e-2), \
        "general (nonzero lora_b) mismatch"

    # scaling_rank==1 & rank==0 fast path (training mode: both factors applied).
    out_fast = jax.block_until_ready(lora_linear_forward_scaling1(
        x, weight, bias, multi_lora_a, multi_lora_b))
    ref_fast = (jnp.einsum("bsi,oi->bso", x * multi_lora_a.reshape(-1), weight)
                + bias) * multi_lora_b.reshape(-1)
    assert jnp.allclose(out_fast, ref_fast, atol=3e-2, rtol=3e-2), \
        "scaling_rank==1 fast path mismatch"

    print("KERNEL_OK")
</pallas_src>

<mosaic_0001>
module attributes {stable_mosaic.version = 11 : i64} {
  func.func @_weff_kernel(%arg0: i32, %arg1: i32, %arg2: memref<256x256xf32, #tpu.memory_space<vmem>>, %arg3: memref<1x256xf32, #tpu.memory_space<vmem>>, %arg4: memref<256x1xf32, #tpu.memory_space<vmem>>, %arg5: memref<4x256xf32, #tpu.memory_space<vmem>>, %arg6: memref<256x4xf32, #tpu.memory_space<vmem>>, %arg7: memref<256x256xbf16, #tpu.memory_space<vmem>>) attributes {dimension_semantics = [#tpu.dimension_semantics<parallel>, #tpu.dimension_semantics<parallel>], iteration_bounds = array<i64: 1, 1>, scalar_prefetch = 0 : i64, scratch_operands = 0 : i64, tpu.core_type = #tpu.core_type<tc>, window_params = [{transform_indices = @transform_0, window_bounds = array<i64: 256, 256>}, {transform_indices = @transform_1, window_bounds = array<i64: 1, 256>}, {transform_indices = @transform_2, window_bounds = array<i64: 256, 1>}, {transform_indices = @transform_3, window_bounds = array<i64: 4, 256>}, {transform_indices = @transform_4, window_bounds = array<i64: 256, 4>}, {transform_indices = @transform_5, window_bounds = array<i64: 256, 256>}]} {
    %c0 = arith.constant 0 : index
    %c0_0 = arith.constant 0 : index
    %0 = vector.load %arg2[%c0, %c0_0] : memref<256x256xf32, #tpu.memory_space<vmem>>, vector<256x256xf32>
    %c0_1 = arith.constant 0 : index
    %c0_2 = arith.constant 0 : index
    %1 = vector.load %arg4[%c0_1, %c0_2] : memref<256x1xf32, #tpu.memory_space<vmem>>, vector<256x1xf32>
    %c0_3 = arith.constant 0 : index
    %c0_4 = arith.constant 0 : index
    %2 = vector.load %arg3[%c0_3, %c0_4] : memref<1x256xf32, #tpu.memory_space<vmem>>, vector<1x256xf32>
    %3 = vector.broadcast %1 : vector<256x1xf32> to vector<256x256xf32>
    %4 = vector.broadcast %2 : vector<1x256xf32> to vector<256x256xf32>
    %5 = arith.mulf %3, %4 : vector<256x256xf32>
    %6 = arith.mulf %0, %5 : vector<256x256xf32>
    %c0_5 = arith.constant 0 : index
    %c0_6 = arith.constant 0 : index
    %7 = vector.load %arg6[%c0_5, %c0_6] : memref<256x4xf32, #tpu.memory_space<vmem>>, vector<256x4xf32>
    %c0_7 = arith.constant 0 : index
    %c0_8 = arith.constant 0 : index
    %8 = vector.load %arg5[%c0_7, %c0_8] : memref<4x256xf32, #tpu.memory_space<vmem>>, vector<4x256xf32>
    %cst = arith.constant dense<0.000000e+00> : vector<256x256xf32>
    %9 = tpu.matmul %7, %8, %cst {dimension_numbers = #tpu.dot_dimension_numbers<[1], [0], [0], [1], [0, 0, 1, 1], [], []>} : vector<256x4xf32>, vector<4x256xf32>, vector<256x256xf32> -> vector<256x256xf32>
    %10 = arith.addf %6, %9 : vector<256x256xf32>
    %11 = arith.truncf %10 : vector<256x256xf32> to vector<256x256xbf16>
    %c0_9 = arith.constant 0 : index
    %c0_10 = arith.constant 0 : index
    %12 = vector.load %arg7[%c0_9, %c0_10] : memref<256x256xbf16, #tpu.memory_space<vmem>>, vector<256x256xbf16>
    tpu.vector_store %arg7[%c0_9, %c0_10], %11 {strides = array<i32>} : memref<256x256xbf16, #tpu.memory_space<vmem>>, vector<256x256xbf16>,
    return
  }
  func.func @transform_0(%arg0: i32, %arg1: i32) -> (i32, i32) {
    %c0_i32 = arith.constant 0 : i32
    return %arg0, %arg1 : i32, i32
  }
  func.func @transform_1(%arg0: i32, %arg1: i32) -> (i32, i32) {
    %c0_i32 = arith.constant 0 : i32
    %c0_i32_0 = arith.constant 0 : i32
    return %c0_i32, %arg1 : i32, i32
  }
  func.func @transform_2(%arg0: i32, %arg1: i32) -> (i32, i32) {
    %c0_i32 = arith.constant 0 : i32
    %c0_i32_0 = arith.constant 0 : i32
    return %arg0, %c0_i32 : i32, i32
  }
  func.func @transform_3(%arg0: i32, %arg1: i32) -> (i32, i32) {
    %c0_i32 = arith.constant 0 : i32
    %c0_i32_0 = arith.constant 0 : i32
    return %c0_i32, %arg1 : i32, i32
  }
  func.func @transform_4(%arg0: i32, %arg1: i32) -> (i32, i32) {
    %c0_i32 = arith.constant 0 : i32
    %c0_i32_0 = arith.constant 0 : i32
    return %arg0, %c0_i32 : i32, i32
  }
  func.func @transform_5(%arg0: i32, %arg1: i32) -> (i32, i32) {
    %c0_i32 = arith.constant 0 : i32
    return %arg0, %arg1 : i32, i32
  }
}

</mosaic_0001>

<llo_original>
// kernel: tpu_custom_call.1
$region0: #{tpu_custom_call.1}
  #allocation0 [shape = 'u32[]', space=smem, size = 0x4, offset = 0x4, fixed_abs, tag = 'smem constant byte address 0x4 - core index']
  #allocation1 [shape = 'u32[72,128]{1,0:T(1,128)}', space=vmem, size = 0x9000, scoped, tag = 'internal scratch']
  %s0 = inlined_call_operand.vmem [shape: f32[256,256], index: 0, kind: input, shape index: {}]
  %s1 = inlined_call_operand.vmem [shape: f32[1,256], index: 1, kind: input, shape index: {}]
  %s2 = inlined_call_operand.vmem [shape: f32[256,1], index: 2, kind: input, shape index: {}]
  %s3 = inlined_call_operand.hbm [shape: f32[4,256], index: 3, kind: input, shape index: {}]
  %s4 = inlined_call_operand.vmem [shape: f32[256,4], index: 4, kind: input, shape index: {}]
  %s5 = inlined_call_operand.hbm [shape: bf16[256,256], index: 5, kind: output, shape index: {}]
  %s6 = sld [smem:[#allocation0]]
  $region34: #{tpu_custom_call.1} parent=0
    _
  %s8 = ssub.s32 1, %s6
  %s9 = scalar_select 0, %s8, %s6
  $region1: #{tpu_custom_call.1} parent=0
    #allocation2 [shape = 'u8[4096]{0}', space=vmem, size = 0x1000, scoped, tag = 'input window, operand 3, single buffered']
    #allocation3 [shape = 's32[1]{0}', space=sflag, size = 0x4, scoped, tag = 'scoped memory for tpu_custom_call.1']
    #allocation4 [shape = 's32[1]{0}', space=sflag, size = 0x4, scoped, tag = 'scoped memory for tpu_custom_call.1']
    #allocation5 [shape = 'u8[131072]{0}', space=vmem, size = 0x20000, scoped, tag = 'output window, operand 0, single buffered']
    %10 = vsyncpa [#allocation3], 0
    %11 = vsyncpa [#allocation4], 0
    // Predicated region
    $region2: #{tpu_custom_call.1} parent=1 // pred_check
      _
    $region3: #{tpu_custom_call.1} parent=1 // pred_check_branch
      %13 = sbr.rel (0) target = $region5
    $region4: #{tpu_custom_call.1} parent=1 // pred_region
      _
    $region5: #{tpu_custom_call.1} parent=1 // pred_fallthru
      _
    // Predicated region
    $region6: #{tpu_custom_call.1} parent=1 // pred_check
      _
    $region7: #{tpu_custom_call.1} parent=1 // pred_check_branch
      %15 = sbr.rel (0) target = $region9
    $region8: #{tpu_custom_call.1} parent=1 // pred_region
      _
    $region9: #{tpu_custom_call.1} parent=1 // pred_fallthru
      _
    // Predicated region
    $region10: #{tpu_custom_call.1} parent=1 // pred_check
      _
    $region11: #{tpu_custom_call.1} parent=1 // pred_check_branch
      %17 = sbr.rel (0) target = $region13
    $region12: #{tpu_custom_call.1} parent=1 // pred_region
      _
    $region13: #{tpu_custom_call.1} parent=1 // pred_fallthru
      _
    // Predicated region
    $region14: #{tpu_custom_call.1} parent=1 // pred_check
      _
    $region15: #{tpu_custom_call.1} parent=1 // pred_check_branch
      %19 = sbr.rel (0) target = $region17
    $region16: #{tpu_custom_call.1} parent=1 // pred_region
      %21 = vsyncadd [#allocation3], 0
      %s23 = sshll.u32 %s3, 4
      %s24 = int_to_ptr.hbm [resolvable:$true] %s23
      %s25 = sshll.u32 [#allocation2], 4
      %s26 = int_to_ptr.vmem [resolvable:$true] %s25
      %28 = dma.hbm_to_vmem [thread:$0]  %s24, 128, %s26, [#allocation3]
    $region17: #{tpu_custom_call.1} parent=1 // pred_fallthru
      _
    // Predicated region
    $region18: #{tpu_custom_call.1} parent=1 // pred_check
      _
    $region19: #{tpu_custom_call.1} parent=1 // pred_check_branch
      %30 = sbr.rel (0) target = $region21
    $region20: #{tpu_custom_call.1} parent=1 // pred_region
      _
    $region21: #{tpu_custom_call.1} parent=1 // pred_fallthru
      _
    // Predicated region
    $region22: #{tpu_custom_call.1} parent=1 // pred_check
      _
    $region23: #{tpu_custom_call.1} parent=1 // pred_check_branch
      %32 = sbr.rel (0) target = $region25
    $region24: #{tpu_custom_call.1} parent=1 // pred_region
      %34 = dma.done [#allocation3], 128
    $region25: #{tpu_custom_call.1} parent=1 // pred_fallthru
      _
    %v35 = vld [vmem:[%s0] sm:$0xff]
    %v36 = vld [vmem:[%s0 + $0x8] sm:$0xff]
    %v37 = vld [vmem:[%s0 + $0x10] sm:$0xff]
    %v38 = vld [vmem:[%s0 + $0x18] sm:$0xff]
    %v39 = vld [vmem:[%s0 + $0x20] sm:$0xff]
    %v40 = vld [vmem:[%s0 + $0x28] sm:$0xff]
    %v41 = vld [vmem:[%s0 + $0x30] sm:$0xff]
    %v42 = vld [vmem:[%s0 + $0x38] sm:$0xff]
    %v43 = vld [vmem:[%s0 + $0x40] sm:$0xff]
    %v44 = vld [vmem:[%s0 + $0x48] sm:$0xff]
    %v45 = vld [vmem:[%s0 + $0x50] sm:$0xff]
    %v46 = vld [vmem:[%s0 + $0x58] sm:$0xff]
    %v47 = vld [vmem:[%s0 + $0x60] sm:$0xff]
    %v48 = vld [vmem:[%s0 + $0x68] sm:$0xff]
    %v49 = vld [vmem:[%s0 + $0x70] sm:$0xff]
    %v50 = vld [vmem:[%s0 + $0x78] sm:$0xff]
    %v51 = vld [vmem:[%s0 + $0x80] sm:$0xff]
    %v52 = vld [vmem:[%s0 + $0x88] sm:$0xff]
    %v53 = vld [vmem:[%s0 + $0x90] sm:$0xff]
    %v54 = vld [vmem:[%s0 + $0x98] sm:$0xff]
    %v55 = vld [vmem:[%s0 + $0xa0] sm:$0xff]
    %v56 = vld [vmem:[%s0 + $0xa8] sm:$0xff]
    %v57 = vld [vmem:[%s0 + $0xb0] sm:$0xff]
    %v58 = vld [vmem:[%s0 + $0xb8] sm:$0xff]
    %v59 = vld [vmem:[%s0 + $0xc0] sm:$0xff]
    %v60 = vld [vmem:[%s0 + $0xc8] sm:$0xff]
    %v61 = vld [vmem:[%s0 + $0xd0] sm:$0xff]
    %v62 = vld [vmem:[%s0 + $0xd8] sm:$0xff]
    %v63 = vld [vmem:[%s0 + $0xe0] sm:$0xff]
    %v64 = vld [vmem:[%s0 + $0xe8] sm:$0xff]
    %v65 = vld [vmem:[%s0 + $0xf0] sm:$0xff]
    %v66 = vld [vmem:[%s0 + $0xf8] sm:$0xff]
    %v67 = vld [vmem:[%s0 + $0x100] sm:$0xff]
    %v68 = vld [vmem:[%s0 + $0x108] sm:$0xff]
    %v69 = vld [vmem:[%s0 + $0x110] sm:$0xff]
    %v70 = vld [vmem:[%s0 + $0x118] sm:$0xff]
    %v71 = vld [vmem:[%s0 + $0x120] sm:$0xff]
    %v72 = vld [vmem:[%s0 + $0x128] sm:$0xff]
    %v73 = vld [vmem:[%s0 + $0x130] sm:$0xff]
    %v74 = vld [vmem:[%s0 + $0x138] sm:$0xff]
    %v75 = vld [vmem:[%s0 + $0x140] sm:$0xff]
    %v76 = vld [vmem:[%s0 + $0x148] sm:$0xff]
    %v77 = vld [vmem:[%s0 + $0x150] sm:$0xff]
    %v78 = vld [vmem:[%s0 + $0x158] sm:$0xff]
    %v79 = vld [vmem:[%s0 + $0x160] sm:$0xff]
    %v80 = vld [vmem:[%s0 + $0x168] sm:$0xff]
    %v81 = vld [vmem:[%s0 + $0x170] sm:$0xff]
    %v82 = vld [vmem:[%s0 + $0x178] sm:$0xff]
    %v83 = vld [vmem:[%s0 + $0x180] sm:$0xff]
    %v84 = vld [vmem:[%s0 + $0x188] sm:$0xff]
    %v85 = vld [vmem:[%s0 + $0x190] sm:$0xff]
    %v86 = vld [vmem:[%s0 + $0x198] sm:$0xff]
    %v87 = vld [vmem:[%s0 + $0x1a0] sm:$0xff]
    %v88 = vld [vmem:[%s0 + $0x1a8] sm:$0xff]
    %v89 = vld [vmem:[%s0 + $0x1b0] sm:$0xff]
    %v90 = vld [vmem:[%s0 + $0x1b8] sm:$0xff]
    %v91 = vld [vmem:[%s0 + $0x1c0] sm:$0xff]
    %v92 = vld [vmem:[%s0 + $0x1c8] sm:$0xff]
    %v93 = vld [vmem:[%s0 + $0x1d0] sm:$0xff]
    %v94 = vld [vmem:[%s0 + $0x1d8] sm:$0xff]
    %v95 = vld [vmem:[%s0 + $0x1e0] sm:$0xff]
    %v96 = vld [vmem:[%s0 + $0x1e8] sm:$0xff]
    %v97 = vld [vmem:[%s0 + $0x1f0] sm:$0xff]
    %v98 = vld [vmem:[%s0 + $0x1f8] sm:$0xff]
    %v99 = vld [vmem:[%s2] sm:$0xff]
    %v100 = vld [vmem:[%s2 + $0x8] sm:$0xff]
    %v101 = vld [vmem:[%s2 + $0x10] sm:$0xff]
    %v102 = vld [vmem:[%s2 + $0x18] sm:$0xff]
    %v103 = vld [vmem:[%s2 + $0x20] sm:$0xff]
    %v104 = vld [vmem:[%s2 + $0x28] sm:$0xff]
    %v105 = vld [vmem:[%s2 + $0x30] sm:$0xff]
    %v106 = vld [vmem:[%s2 + $0x38] sm:$0xff]
    %v107 = vld [vmem:[%s2 + $0x40] sm:$0xff]
    %v108 = vld [vmem:[%s2 + $0x48] sm:$0xff]
    %v109 = vld [vmem:[%s2 + $0x50] sm:$0xff]
    %v110 = vld [vmem:[%s2 + $0x58] sm:$0xff]
    %v111 = vld [vmem:[%s2 + $0x60] sm:$0xff]
    %v112 = vld [vmem:[%s2 + $0x68] sm:$0xff]
    %v113 = vld [vmem:[%s2 + $0x70] sm:$0xff]
    %v114 = vld [vmem:[%s2 + $0x78] sm:$0xff]
    %v115 = vld [vmem:[%s2 + $0x80] sm:$0xff]
    %v116 = vld [vmem:[%s2 + $0x88] sm:$0xff]
    %v117 = vld [vmem:[%s2 + $0x90] sm:$0xff]
    %v118 = vld [vmem:[%s2 + $0x98] sm:$0xff]
    %v119 = vld [vmem:[%s2 + $0xa0] sm:$0xff]
    %v120 = vld [vmem:[%s2 + $0xa8] sm:$0xff]
    %v121 = vld [vmem:[%s2 + $0xb0] sm:$0xff]
    %v122 = vld [vmem:[%s2 + $0xb8] sm:$0xff]
    %v123 = vld [vmem:[%s2 + $0xc0] sm:$0xff]
    %v124 = vld [vmem:[%s2 + $0xc8] sm:$0xff]
    %v125 = vld [vmem:[%s2 + $0xd0] sm:$0xff]
    %v126 = vld [vmem:[%s2 + $0xd8] sm:$0xff]
    %v127 = vld [vmem:[%s2 + $0xe0] sm:$0xff]
    %v128 = vld [vmem:[%s2 + $0xe8] sm:$0xff]
    %v129 = vld [vmem:[%s2 + $0xf0] sm:$0xff]
    %v130 = vld [vmem:[%s2 + $0xf8] sm:$0xff]
    %v131 = vld [vmem:[%s1] sm:$0x3]
    %133 = vset.pattern.permute.xlu0 0
    %134 = vperm.xlu0 %133, %v99
    %v135 = vpop.permute.xlu0 %134
    %138 = vset.pattern.permute.xlu0 0
    %139 = vperm.xlu0 %138, %v100
    %v140 = vpop.permute.xlu0 %139
    %143 = vset.pattern.permute.xlu0 0
    %144 = vperm.xlu0 %143, %v101
    %v145 = vpop.permute.xlu0 %144
    %148 = vset.pattern.permute.xlu0 0
    %149 = vperm.xlu0 %148, %v102
    %v150 = vpop.permute.xlu0 %149
    %153 = vset.pattern.permute.xlu0 0
    %154 = vperm.xlu0 %153, %v103
    %v155 = vpop.permute.xlu0 %154
    %158 = vset.pattern.permute.xlu0 0
    %159 = vperm.xlu0 %158, %v104
    %v160 = vpop.permute.xlu0 %159
    %163 = vset.pattern.permute.xlu0 0
    %164 = vperm.xlu0 %163, %v105
    %v165 = vpop.permute.xlu0 %164
    %168 = vset.pattern.permute.xlu0 0
    %169 = vperm.xlu0 %168, %v106
    %v170 = vpop.permute.xlu0 %169
    %173 = vset.pattern.permute.xlu0 0
    %174 = vperm.xlu0 %173, %v107
    %v175 = vpop.permute.xlu0 %174
    %178 = vset.pattern.permute.xlu0 0
    %179 = vperm.xlu0 %178, %v108
    %v180 = vpop.permute.xlu0 %179
    %183 = vset.pattern.permute.xlu0 0
    %184 = vperm.xlu0 %183, %v109
    %v185 = vpop.permute.xlu0 %184
    %188 = vset.pattern.permute.xlu0 0
    %189 = vperm.xlu0 %188, %v110
    %v190 = vpop.permute.xlu0 %189
    %193 = vset.pattern.permute.xlu0 0
    %194 = vperm.xlu0 %193, %v111
    %v195 = vpop.permute.xlu0 %194
    %198 = vset.pattern.permute.xlu0 0
    %199 = vperm.xlu0 %198, %v112
    %v200 = vpop.permute.xlu0 %199
    %203 = vset.pattern.permute.xlu0 0
    %204 = vperm.xlu0 %203, %v113
    %v205 = vpop.permute.xlu0 %204
    %208 = vset.pattern.permute.xlu0 0
    %209 = vperm.xlu0 %208, %v114
    %v210 = vpop.permute.xlu0 %209
    %213 = vset.pattern.permute.xlu0 0
    %214 = vperm.xlu0 %213, %v115
    %v215 = vpop.permute.xlu0 %214
    %218 = vset.pattern.permute.xlu0 0
    %219 = vperm.xlu0 %218, %v116
    %v220 = vpop.permute.xlu0 %219
    %223 = vset.pattern.permute.xlu0 0
    %224 = vperm.xlu0 %223, %v117
    %v225 = vpop.permute.xlu0 %224
    %228 = vset.pattern.permute.xlu0 0
    %229 = vperm.xlu0 %228, %v118
    %v230 = vpop.permute.xlu0 %229
    %233 = vset.pattern.permute.xlu0 0
    %234 = vperm.xlu0 %233, %v119
    %v235 = vpop.permute.xlu0 %234
    %238 = vset.pattern.permute.xlu0 0
    %239 = vperm.xlu0 %238, %v120
    %v240 = vpop.permute.xlu0 %239
    %243 = vset.pattern.permute.xlu0 0
    %244 = vperm.xlu0 %243, %v121
    %v245 = vpop.permute.xlu0 %244
    %248 = vset.pattern.permute.xlu0 0
    %249 = vperm.xlu0 %248, %v122
    %v250 = vpop.permute.xlu0 %249
    %253 = vset.pattern.permute.xlu0 0
    %254 = vperm.xlu0 %253, %v123
    %v255 = vpop.permute.xlu0 %254
    %258 = vset.pattern.permute.xlu0 0
    %259 = vperm.xlu0 %258, %v124
    %v260 = vpop.permute.xlu0 %259
    %263 = vset.pattern.permute.xlu0 0
    %264 = vperm.xlu0 %263, %v125
    %v265 = vpop.permute.xlu0 %264
    %268 = vset.pattern.permute.xlu0 0
    %269 = vperm.xlu0 %268, %v126
    %v270 = vpop.permute.xlu0 %269
    %273 = vset.pattern.permute.xlu0 0
    %274 = vperm.xlu0 %273, %v127
    %v275 = vpop.permute.xlu0 %274
    %278 = vset.pattern.permute.xlu0 0
    %279 = vperm.xlu0 %278, %v128
    %v280 = vpop.permute.xlu0 %279
    %283 = vset.pattern.permute.xlu0 0
    %284 = vperm.xlu0 %283, %v129
    %v285 = vpop.permute.xlu0 %284
    %288 = vset.pattern.permute.xlu0 0
    %289 = vperm.xlu0 %288, %v130
    %v290 = vpop.permute.xlu0 %289
    %v293 = vperm.slane %v131, 0
    %v294 = vperm.slane %v131, 1
    %v297 = vmul.f32 %v135, %v293
    %v298 = vmul.f32 %v135, %v294
    %v299 = vmul.f32 %v140, %v293
    %v300 = vmul.f32 %v140, %v294
    %v301 = vmul.f32 %v145, %v293
    %v302 = vmul.f32 %v145, %v294
    %v303 = vmul.f32 %v150, %v293
    %v304 = vmul.f32 %v150, %v294
    %v305 = vmul.f32 %v155, %v293
    %v306 = vmul.f32 %v155, %v294
    %v307 = vmul.f32 %v160, %v293
    %v308 = vmul.f32 %v160, %v294
    %v309 = vmul.f32 %v165, %v293
    %v310 = vmul.f32 %v165, %v294
    %v311 = vmul.f32 %v170, %v293
    %v312 = vmul.f32 %v170, %v294
    %v313 = vmul.f32 %v175, %v293
    %v314 = vmul.f32 %v175, %v294
    %v315 = vmul.f32 %v180, %v293
    %v316 = vmul.f32 %v180, %v294
    %v317 = vmul.f32 %v185, %v293
    %v318 = vmul.f32 %v185, %v294
    %v319 = vmul.f32 %v190, %v293
    %v320 = vmul.f32 %v190, %v294
    %v321 = vmul.f32 %v195, %v293
    %v322 = vmul.f32 %v195, %v294
    %v323 = vmul.f32 %v200, %v293
    %v324 = vmul.f32 %v200, %v294
    %v325 = vmul.f32 %v205, %v293
    %v326 = vmul.f32 %v205, %v294
    %v327 = vmul.f32 %v210, %v293
    %v328 = vmul.f32 %v210, %v294
    %v329 = vmul.f32 %v215, %v293
    %v330 = vmul.f32 %v215, %v294
    %v331 = vmul.f32 %v220, %v293
    %v332 = vmul.f32 %v220, %v294
    %v333 = vmul.f32 %v225, %v293
    %v334 = vmul.f32 %v225, %v294
    %v335 = vmul.f32 %v230, %v293
    %v336 = vmul.f32 %v230, %v294
    %v337 = vmul.f32 %v235, %v293
    %v338 = vmul.f32 %v235, %v294
    %v339 = vmul.f32 %v240, %v293
    %v340 = vmul.f32 %v240, %v294
    %v341 = vmul.f32 %v245, %v293
    %v342 = vmul.f32 %v245, %v294
    %v343 = vmul.f32 %v250, %v293
    %v344 = vmul.f32 %v250, %v294
    %v345 = vmul.f32 %v255, %v293
    %v346 = vmul.f32 %v255, %v294
    %v347 = vmul.f32 %v260, %v293
    %v348 = vmul.f32 %v260, %v294
    %v349 = vmul.f32 %v265, %v293
    %v350 = vmul.f32 %v265, %v294
    %v351 = vmul.f32 %v270, %v293
    %v352 = vmul.f32 %v270, %v294
    %v353 = vmul.f32 %v275, %v293
    %v354 = vmul.f32 %v275, %v294
    %v355 = vmul.f32 %v280, %v293
    %v356 = vmul.f32 %v280, %v294
    %v357 = vmul.f32 %v285, %v293
    %v358 = vmul.f32 %v285, %v294
    %v359 = vmul.f32 %v290, %v293
    %v360 = vmul.f32 %v290, %v294
    %v361 = vmul.f32 %v35, %v297
    %v362 = vmul.f32 %v36, %v298
    %v363 = vmul.f32 %v37, %v299
    %v364 = vmul.f32 %v38, %v300
    %v365 = vmul.f32 %v39, %v301
    %v366 = vmul.f32 %v40, %v302
    %v367 = vmul.f32 %v41, %v303
    %v368 = vmul.f32 %v42, %v304
    %v369 = vmul.f32 %v43, %v305
    %v370 = vmul.f32 %v44, %v306
    %v371 = vmul.f32 %v45, %v307
    %v372 = vmul.f32 %v46, %v308
    %v373 = vmul.f32 %v47, %v309
    %v374 = vmul.f32 %v48, %v310
    %v375 = vmul.f32 %v49, %v311
    %v376 = vmul.f32 %v50, %v312
    %v377 = vmul.f32 %v51, %v313
    %v378 = vmul.f32 %v52, %v314
    %v379 = vmul.f32 %v53, %v315
    %v380 = vmul.f32 %v54, %v316
    %v381 = vmul.f32 %v55, %v317
    %v382 = vmul.f32 %v56, %v318
    %v383 = vmul.f32 %v57, %v319
    %v384 = vmul.f32 %v58, %v320
    %v385 = vmul.f32 %v59, %v321
    %v386 = vmul.f32 %v60, %v322
    %v387 = vmul.f32 %v61, %v323
    %v388 = vmul.f32 %v62, %v324
    %v389 = vmul.f32 %v63, %v325
    %v390 = vmul.f32 %v64, %v326
    %v391 = vmul.f32 %v65, %v327
    %v392 = vmul.f32 %v66, %v328
    %v393 = vmul.f32 %v67, %v329
    %v394 = vmul.f32 %v68, %v330
    %v395 = vmul.f32 %v69, %v331
    %v396 = vmul.f32 %v70, %v332
    %v397 = vmul.f32 %v71, %v333
    %v398 = vmul.f32 %v72, %v334
    %v399 = vmul.f32 %v73, %v335
    %v400 = vmul.f32 %v74, %v336
    %v401 = vmul.f32 %v75, %v337
    %v402 = vmul.f32 %v76, %v338
    %v403 = vmul.f32 %v77, %v339
    %v404 = vmul.f32 %v78, %v340
    %v405 = vmul.f32 %v79, %v341
    %v406 = vmul.f32 %v80, %v342
    %v407 = vmul.f32 %v81, %v343
    %v408 = vmul.f32 %v82, %v344
    %v409 = vmul.f32 %v83, %v345
    %v410 = vmul.f32 %v84, %v346
    %v411 = vmul.f32 %v85, %v347
    %v412 = vmul.f32 %v86, %v348
    %v413 = vmul.f32 %v87, %v349
    %v414 = vmul.f32 %v88, %v350
    %v415 = vmul.f32 %v89, %v351
    %v416 = vmul.f32 %v90, %v352
    %v417 = vmul.f32 %v91, %v353
    %v418 = vmul.f32 %v92, %v354
    %v419 = vmul.f32 %v93, %v355
    %v420 = vmul.f32 %v94, %v356
    %v421 = vmul.f32 %v95, %v357
    %v422 = vmul.f32 %v96, %v358
    %v423 = vmul.f32 %v97, %v359
    %v424 = vmul.f32 %v98, %v360
    %v425 = vld [vmem:[%s4] sm:$0xff]
    %v426 = vld [vmem:[%s4 + $0x8] sm:$0xff]
    %v427 = vld [vmem:[%s4 + $0x10] sm:$0xff]
    %v428 = vld [vmem:[%s4 + $0x18] sm:$0xff]
    %v429 = vld [vmem:[%s4 + $0x20] sm:$0xff]
    %v430 = vld [vmem:[%s4 + $0x28] sm:$0xff]
    %v431 = vld [vmem:[%s4 + $0x30] sm:$0xff]
    %v432 = vld [vmem:[%s4 + $0x38] sm:$0xff]
    %v433 = vld [vmem:[%s4 + $0x40] sm:$0xff]
    %v434 = vld [vmem:[%s4 + $0x48] sm:$0xff]
    %v435 = vld [vmem:[%s4 + $0x50] sm:$0xff]
    %v436 = vld [vmem:[%s4 + $0x58] sm:$0xff]
    %v437 = vld [vmem:[%s4 + $0x60] sm:$0xff]
    %v438 = vld [vmem:[%s4 + $0x68] sm:$0xff]
    %v439 = vld [vmem:[%s4 + $0x70] sm:$0xff]
    %v440 = vld [vmem:[%s4 + $0x78] sm:$0xff]
    %v441 = vld [vmem:[%s4 + $0x80] sm:$0xff]
    %v442 = vld [vmem:[%s4 + $0x88] sm:$0xff]
    %v443 = vld [vmem:[%s4 + $0x90] sm:$0xff]
    %v444 = vld [vmem:[%s4 + $0x98] sm:$0xff]
    %v445 = vld [vmem:[%s4 + $0xa0] sm:$0xff]
    %v446 = vld [vmem:[%s4 + $0xa8] sm:$0xff]
    %v447 = vld [vmem:[%s4 + $0xb0] sm:$0xff]
    %v448 = vld [vmem:[%s4 + $0xb8] sm:$0xff]
    %v449 = vld [vmem:[%s4 + $0xc0] sm:$0xff]
    %v450 = vld [vmem:[%s4 + $0xc8] sm:$0xff]
    %v451 = vld [vmem:[%s4 + $0xd0] sm:$0xff]
    %v452 = vld [vmem:[%s4 + $0xd8] sm:$0xff]
    %v453 = vld [vmem:[%s4 + $0xe0] sm:$0xff]
    %v454 = vld [vmem:[%s4 + $0xe8] sm:$0xff]
    %v455 = vld [vmem:[%s4 + $0xf0] sm:$0xff]
    %v456 = vld [vmem:[%s4 + $0xf8] sm:$0xff]
    %v457 = vld [vmem:[#allocation2] sm:$0xff]
    %459 = vst [vmem:[#allocation1] ss:$2 sm:$0xff] %v457
    %v460 = vld.sshfl [vmem:[#allocation1] sm:$0xff pattern:$0x75316420]
    %v461 = vld.sshfl [vmem:[#allocation1 + $0x8] sm:$0xff pattern:$0x75316420]
    %vm462 = vcmask 31744
    %v464 = vsel %vm462, %v425, 0
    %v467 = vsel %vm462, %v426, 0
    %v470 = vsel %vm462, %v427, 0
    %v473 = vsel %vm462, %v428, 0
    %v476 = vsel %vm462, %v429, 0
    %v479 = vsel %vm462, %v430, 0
    %v482 = vsel %vm462, %v431, 0
    %v485 = vsel %vm462, %v432, 0
    %v488 = vsel %vm462, %v433, 0
    %v491 = vsel %vm462, %v434, 0
    %v494 = vsel %vm462, %v435, 0
    %v497 = vsel %vm462, %v436, 0
    %v500 = vsel %vm462, %v437, 0
    %v503 = vsel %vm462, %v438, 0
    %v506 = vsel %vm462, %v439, 0
    %v509 = vsel %vm462, %v440, 0
    %v512 = vsel %vm462, %v441, 0
    %v515 = vsel %vm462, %v442, 0
    %v518 = vsel %vm462, %v443, 0
    %v521 = vsel %vm462, %v444, 0
    %v524 = vsel %vm462, %v445, 0
    %v527 = vsel %vm462, %v446, 0
    %v530 = vsel %vm462, %v447, 0
    %v533 = vsel %vm462, %v448, 0
    %v536 = vsel %vm462, %v449, 0
    %v539 = vsel %vm462, %v450, 0
    %v542 = vsel %vm462, %v451, 0
    %v545 = vsel %vm462, %v452, 0
    %v548 = vsel %vm462, %v453, 0
    %v551 = vsel %vm462, %v454, 0
    %v554 = vsel %vm462, %v455, 0
    %v557 = vsel %vm462, %v456, 0
    %vm559 = vcmask 1043456
    %v560 = vsel %vm559, %v460, 0
    %v562 = vsel %vm559, %v461, 0
    %564 = vmatpush.msra.mxu0 0.0
    %565 = vmatpush.msra.mxu0 0.0
    %566 = vmatpush.msra.mxu0 0.0
    %567 = vmatpush.msra.mxu0 0.0
    %568 = vmatpush.msra.mxu0 0.0
    %569 = vmatpush.msra.mxu0 0.0
    %570 = vmatpush.msra.mxu0 0.0
    %571 = vmatpush.msra.mxu0 0.0
    %572 = vmatpush.msra.mxu0 0.0
    %573 = vmatpush.msra.mxu0 0.0
    %574 = vmatpush.msra.mxu0 0.0
    %575 = vmatpush.msra.mxu0 0.0
    %576 = vmatpush.msra.mxu0 0.0
    %577 = vmatpush.msra.mxu0 0.0
    %578 = vmatpush.msra.mxu0 0.0
    %579 = vmatpush.msra.mxu0 %v560
    %580 = vmatmul.f32.gmra.mxu0 %v464
    %v581 = vpop.f32.mrf.mxu0
    %v582 = vadd.f32 0.0, %v581
    %583 = vmatmul.f32.gmra.mxu0 %v467
    %v584 = vpop.f32.mrf.mxu0
    %v585 = vadd.f32 0.0, %v584
    %586 = vmatmul.f32.gmra.mxu0 %v470
    %v587 = vpop.f32.mrf.mxu0
    %v588 = vadd.f32 0.0, %v587
    %589 = vmatmul.f32.gmra.mxu0 %v473
    %v590 = vpop.f32.mrf.mxu0
    %v591 = vadd.f32 0.0, %v590
    %592 = vmatmul.f32.gmra.mxu0 %v476
    %v593 = vpop.f32.mrf.mxu0
    %v594 = vadd.f32 0.0, %v593
    %595 = vmatmul.f32.gmra.mxu0 %v479
    %v596 = vpop.f32.mrf.mxu0
    %v597 = vadd.f32 0.0, %v596
    %598 = vmatmul.f32.gmra.mxu0 %v482
    %v599 = vpop.f32.mrf.mxu0
    %v600 = vadd.f32 0.0, %v599
    %601 = vmatmul.f32.gmra.mxu0 %v485
    %v602 = vpop.f32.mrf.mxu0
    %v603 = vadd.f32 0.0, %v602
    %604 = vmatmul.f32.gmra.mxu0 %v488
    %v605 = vpop.f32.mrf.mxu0
    %v606 = vadd.f32 0.0, %v605
    %607 = vmatmul.f32.gmra.mxu0 %v491
    %v608 = vpop.f32.mrf.mxu0
    %v609 = vadd.f32 0.0, %v608
    %610 = vmatmul.f32.gmra.mxu0 %v494
    %v611 = vpop.f32.mrf.mxu0
    %v612 = vadd.f32 0.0, %v611
    %613 = vmatmul.f32.gmra.mxu0 %v497
    %v614 = vpop.f32.mrf.mxu0
    %v615 = vadd.f32 0.0, %v614
    %616 = vmatmul.f32.gmra.mxu0 %v500
    %v617 = vpop.f32.mrf.mxu0
    %v618 = vadd.f32 0.0, %v617
    %619 = vmatmul.f32.gmra.mxu0 %v503
    %v620 = vpop.f32.mrf.mxu0
    %v621 = vadd.f32 0.0, %v620
    %622 = vmatmul.f32.gmra.mxu0 %v506
    %v623 = vpop.f32.mrf.mxu0
    %v624 = vadd.f32 0.0, %v623
    %625 = vmatmul.f32.gmra.mxu0 %v509
    %v626 = vpop.f32.mrf.mxu0
    %v627 = vadd.f32 0.0, %v626
    %628 = vmatmul.f32.gmra.mxu0 %v512
    %v629 = vpop.f32.mrf.mxu0
    %v630 = vadd.f32 0.0, %v629
    %631 = vmatmul.f32.gmra.mxu0 %v515
    %v632 = vpop.f32.mrf.mxu0
    %v633 = vadd.f32 0.0, %v632
    %634 = vmatmul.f32.gmra.mxu0 %v518
    %v635 = vpop.f32.mrf.mxu0
    %v636 = vadd.f32 0.0, %v635
    %637 = vmatmul.f32.gmra.mxu0 %v521
    %v638 = vpop.f32.mrf.mxu0
    %v639 = vadd.f32 0.0, %v638
    %640 = vmatmul.f32.gmra.mxu0 %v524
    %v641 = vpop.f32.mrf.mxu0
    %v642 = vadd.f32 0.0, %v641
    %643 = vmatmul.f32.gmra.mxu0 %v527
    %v644 = vpop.f32.mrf.mxu0
    %v645 = vadd.f32 0.0, %v644
    %646 = vmatmul.f32.gmra.mxu0 %v530
    %v647 = vpop.f32.mrf.mxu0
    %v648 = vadd.f32 0.0, %v647
    %649 = vmatmul.f32.gmra.mxu0 %v533
    %v650 = vpop.f32.mrf.mxu0
    %v651 = vadd.f32 0.0, %v650
    %652 = vmatmul.f32.gmra.mxu0 %v536
    %v653 = vpop.f32.mrf.mxu0
    %v654 = vadd.f32 0.0, %v653
    %655 = vmatmul.f32.gmra.mxu0 %v539
    %v656 = vpop.f32.mrf.mxu0
    %v657 = vadd.f32 0.0, %v656
    %658 = vmatmul.f32.gmra.mxu0 %v542
    %v659 = vpop.f32.mrf.mxu0
    %v660 = vadd.f32 0.0, %v659
    %661 = vmatmul.f32.gmra.mxu0 %v545
    %v662 = vpop.f32.mrf.mxu0
    %v663 = vadd.f32 0.0, %v662
    %664 = vmatmul.f32.gmra.mxu0 %v548
    %v665 = vpop.f32.mrf.mxu0
    %v666 = vadd.f32 0.0, %v665
    %667 = vmatmul.f32.gmra.mxu0 %v551
    %v668 = vpop.f32.mrf.mxu0
    %v669 = vadd.f32 0.0, %v668
    %670 = vmatmul.f32.gmra.mxu0 %v554
    %v671 = vpop.f32.mrf.mxu0
    %v672 = vadd.f32 0.0, %v671
    %673 = vmatmul.f32.gmra.mxu0 %v557
    %v674 = vpop.f32.mrf.mxu0
    %v675 = vadd.f32 0.0, %v674
    %676 = vdwg.mxu0
    %677 = vmatpush.msra.mxu0 0.0
    %678 = vmatpush.msra.mxu0 0.0
    %679 = vmatpush.msra.mxu0 0.0
    %680 = vmatpush.msra.mxu0 0.0
    %681 = vmatpush.msra.mxu0 0.0
    %682 = vmatpush.msra.mxu0 0.0
    %683 = vmatpush.msra.mxu0 0.0
    %684 = vmatpush.msra.mxu0 0.0
    %685 = vmatpush.msra.mxu0 0.0
    %686 = vmatpush.msra.mxu0 0.0
    %687 = vmatpush.msra.mxu0 0.0
    %688 = vmatpush.msra.mxu0 0.0
    %689 = vmatpush.msra.mxu0 0.0
    %690 = vmatpush.msra.mxu0 0.0
    %691 = vmatpush.msra.mxu0 0.0
    %692 = vmatpush.msra.mxu0 %v562
    %693 = vmatmul.f32.gmra.mxu0 %v464
    %v694 = vpop.f32.mrf.mxu0
    %v695 = vadd.f32 0.0, %v694
    %696 = vmatmul.f32.gmra.mxu0 %v467
    %v697 = vpop.f32.mrf.mxu0
    %v698 = vadd.f32 0.0, %v697
    %699 = vmatmul.f32.gmra.mxu0 %v470
    %v700 = vpop.f32.mrf.mxu0
    %v701 = vadd.f32 0.0, %v700
    %702 = vmatmul.f32.gmra.mxu0 %v473
    %v703 = vpop.f32.mrf.mxu0
    %v704 = vadd.f32 0.0, %v703
    %705 = vmatmul.f32.gmra.mxu0 %v476
    %v706 = vpop.f32.mrf.mxu0
    %v707 = vadd.f32 0.0, %v706
    %708 = vmatmul.f32.gmra.mxu0 %v479
    %v709 = vpop.f32.mrf.mxu0
    %v710 = vadd.f32 0.0, %v709
    %711 = vmatmul.f32.gmra.mxu0 %v482
    %v712 = vpop.f32.mrf.mxu0
    %v713 = vadd.f32 0.0, %v712
    %714 = vmatmul.f32.gmra.mxu0 %v485
    %v715 = vpop.f32.mrf.mxu0
    %v716 = vadd.f32 0.0, %v715
    %717 = vmatmul.f32.gmra.mxu0 %v488
    %v718 = vpop.f32.mrf.mxu0
    %v719 = vadd.f32 0.0, %v718
    %720 = vmatmul.f32.gmra.mxu0 %v491
    %v721 = vpop.f32.mrf.mxu0
    %v722 = vadd.f32 0.0, %v721
    %723 = vmatmul.f32.gmra.mxu0 %v494
    %v724 = vpop.f32.mrf.mxu0
    %v725 = vadd.f32 0.0, %v724
    %726 = vmatmul.f32.gmra.mxu0 %v497
    %v727 = vpop.f32.mrf.mxu0
    %v728 = vadd.f32 0.0, %v727
    %729 = vmatmul.f32.gmra.mxu0 %v500
    %v730 = vpop.f32.mrf.mxu0
    %v731 = vadd.f32 0.0, %v730
    %732 = vmatmul.f32.gmra.mxu0 %v503
    %v733 = vpop.f32.mrf.mxu0
    %v734 = vadd.f32 0.0, %v733
    %735 = vmatmul.f32.gmra.mxu0 %v506
    %v736 = vpop.f32.mrf.mxu0
    %v737 = vadd.f32 0.0, %v736
    %738 = vmatmul.f32.gmra.mxu0 %v509
    %v739 = vpop.f32.mrf.mxu0
    %v740 = vadd.f32 0.0, %v739
    %741 = vmatmul.f32.gmra.mxu0 %v512
    %v742 = vpop.f32.mrf.mxu0
    %v743 = vadd.f32 0.0, %v742
    %744 = vmatmul.f32.gmra.mxu0 %v515
    %v745 = vpop.f32.mrf.mxu0
    %v746 = vadd.f32 0.0, %v745
    %747 = vmatmul.f32.gmra.mxu0 %v518
    %v748 = vpop.f32.mrf.mxu0
    %v749 = vadd.f32 0.0, %v748
    %750 = vmatmul.f32.gmra.mxu0 %v521
    %v751 = vpop.f32.mrf.mxu0
    %v752 = vadd.f32 0.0, %v751
    %753 = vmatmul.f32.gmra.mxu0 %v524
    %v754 = vpop.f32.mrf.mxu0
    %v755 = vadd.f32 0.0, %v754
    %756 = vmatmul.f32.gmra.mxu0 %v527
    %v757 = vpop.f32.mrf.mxu0
    %v758 = vadd.f32 0.0, %v757
    %759 = vmatmul.f32.gmra.mxu0 %v530
    %v760 = vpop.f32.mrf.mxu0
    %v761 = vadd.f32 0.0, %v760
    %762 = vmatmul.f32.gmra.mxu0 %v533
    %v763 = vpop.f32.mrf.mxu0
    %v764 = vadd.f32 0.0, %v763
    %765 = vmatmul.f32.gmra.mxu0 %v536
    %v766 = vpop.f32.mrf.mxu0
    %v767 = vadd.f32 0.0, %v766
    %768 = vmatmul.f32.gmra.mxu0 %v539
    %v769 = vpop.f32.mrf.mxu0
    %v770 = vadd.f32 0.0, %v769
    %771 = vmatmul.f32.gmra.mxu0 %v542
    %v772 = vpop.f32.mrf.mxu0
    %v773 = vadd.f32 0.0, %v772
    %774 = vmatmul.f32.gmra.mxu0 %v545
    %v775 = vpop.f32.mrf.mxu0
    %v776 = vadd.f32 0.0, %v775
    %777 = vmatmul.f32.gmra.mxu0 %v548
    %v778 = vpop.f32.mrf.mxu0
    %v779 = vadd.f32 0.0, %v778
    %780 = vmatmul.f32.gmra.mxu0 %v551
    %v781 = vpop.f32.mrf.mxu0
    %v782 = vadd.f32 0.0, %v781
    %783 = vmatmul.f32.gmra.mxu0 %v554
    %v784 = vpop.f32.mrf.mxu0
    %v785 = vadd.f32 0.0, %v784
    %786 = vmatmul.f32.gmra.mxu0 %v557
    %v787 = vpop.f32.mrf.mxu0
    %v788 = vadd.f32 0.0, %v787
    %789 = vdwg.mxu0
    %v790 = vadd.f32 %v361, %v582
    %v791 = vadd.f32 %v362, %v695
    %v792 = vadd.f32 %v363, %v585
    %v793 = vadd.f32 %v364, %v698
    %v794 = vadd.f32 %v365, %v588
    %v795 = vadd.f32 %v366, %v701
    %v796 = vadd.f32 %v367, %v591
    %v797 = vadd.f32 %v368, %v704
    %v798 = vadd.f32 %v369, %v594
    %v799 = vadd.f32 %v370, %v707
    %v800 = vadd.f32 %v371, %v597
    %v801 = vadd.f32 %v372, %v710
    %v802 = vadd.f32 %v373, %v600
    %v803 = vadd.f32 %v374, %v713
    %v804 = vadd.f32 %v375, %v603
    %v805 = vadd.f32 %v376, %v716
    %v806 = vadd.f32 %v377, %v606
    %v807 = vadd.f32 %v378, %v719
    %v808 = vadd.f32 %v379, %v609
    %v809 = vadd.f32 %v380, %v722
    %v810 = vadd.f32 %v381, %v612
    %v811 = vadd.f32 %v382, %v725
    %v812 = vadd.f32 %v383, %v615
    %v813 = vadd.f32 %v384, %v728
    %v814 = vadd.f32 %v385, %v618
    %v815 = vadd.f32 %v386, %v731
    %v816 = vadd.f32 %v387, %v621
    %v817 = vadd.f32 %v388, %v734
    %v818 = vadd.f32 %v389, %v624
    %v819 = vadd.f32 %v390, %v737
    %v820 = vadd.f32 %v391, %v627
    %v821 = vadd.f32 %v392, %v740
    %v822 = vadd.f32 %v393, %v630
    %v823 = vadd.f32 %v394, %v743
    %v824 = vadd.f32 %v395, %v633
    %v825 = vadd.f32 %v396, %v746
    %v826 = vadd.f32 %v397, %v636
    %v827 = vadd.f32 %v398, %v749
    %v828 = vadd.f32 %v399, %v639
    %v829 = vadd.f32 %v400, %v752
    %v830 = vadd.f32 %v401, %v642
    %v831 = vadd.f32 %v402, %v755
    %v832 = vadd.f32 %v403, %v645
    %v833 = vadd.f32 %v404, %v758
    %v834 = vadd.f32 %v405, %v648
    %v835 = vadd.f32 %v406, %v761
    %v836 = vadd.f32 %v407, %v651
    %v837 = vadd.f32 %v408, %v764
    %v838 = vadd.f32 %v409, %v654
    %v839 = vadd.f32 %v410, %v767
    %v840 = vadd.f32 %v411, %v657
    %v841 = vadd.f32 %v412, %v770
    %v842 = vadd.f32 %v413, %v660
    %v843 = vadd.f32 %v414, %v773
    %v844 = vadd.f32 %v415, %v663
    %v845 = vadd.f32 %v416, %v776
    %v846 = vadd.f32 %v417, %v666
    %v847 = vadd.f32 %v418, %v779
    %v848 = vadd.f32 %v419, %v669
    %v849 = vadd.f32 %v420, %v782
    %v850 = vadd.f32 %v421, %v672
    %v851 = vadd.f32 %v422, %v785
    %v852 = vadd.f32 %v423, %v675
    %v853 = vadd.f32 %v424, %v788
    %v854 = vpack.c.bf16 %v791, %v790
    %v855 = vpack.c.bf16 %v793, %v792
    %v856 = vpack.c.bf16 %v795, %v794
    %v857 = vpack.c.bf16 %v797, %v796
    %v858 = vpack.c.bf16 %v799, %v798
    %v859 = vpack.c.bf16 %v801, %v800
    %v860 = vpack.c.bf16 %v803, %v802
    %v861 = vpack.c.bf16 %v805, %v804
    %v862 = vpack.c.bf16 %v807, %v806
    %v863 = vpack.c.bf16 %v809, %v808
    %v864 = vpack.c.bf16 %v811, %v810
    %v865 = vpack.c.bf16 %v813, %v812
    %v866 = vpack.c.bf16 %v815, %v814
    %v867 = vpack.c.bf16 %v817, %v816
    %v868 = vpack.c.bf16 %v819, %v818
    %v869 = vpack.c.bf16 %v821, %v820
    %v870 = vpack.c.bf16 %v823, %v822
    %v871 = vpack.c.bf16 %v825, %v824
    %v872 = vpack.c.bf16 %v827, %v826
    %v873 = vpack.c.bf16 %v829, %v828
    %v874 = vpack.c.bf16 %v831, %v830
    %v875 = vpack.c.bf16 %v833, %v832
    %v876 = vpack.c.bf16 %v835, %v834
    %v877 = vpack.c.bf16 %v837, %v836
    %v878 = vpack.c.bf16 %v839, %v838
    %v879 = vpack.c.bf16 %v841, %v840
    %v880 = vpack.c.bf16 %v843, %v842
    %v881 = vpack.c.bf16 %v845, %v844
    %v882 = vpack.c.bf16 %v847, %v846
    %v883 = vpack.c.bf16 %v849, %v848
    %v884 = vpack.c.bf16 %v851, %v850
    %v885 = vpack.c.bf16 %v853, %v852
    %886 = vst [vmem:[#allocation5] sm:$0xff] %v854
    %887 = vst [vmem:[#allocation5 + $0x8] sm:$0xff] %v855
    %888 = vst [vmem:[#allocation5 + $0x10] sm:$0xff] %v856
    %889 = vst [vmem:[#allocation5 + $0x18] sm:$0xff] %v857
    %890 = vst [vmem:[#allocation5 + $0x20] sm:$0xff] %v858
    %891 = vst [vmem:[#allocation5 + $0x28] sm:$0xff] %v859
    %892 = vst [vmem:[#allocation5 + $0x30] sm:$0xff] %v860
    %893 = vst [vmem:[#allocation5 + $0x38] sm:$0xff] %v861
    %894 = vst [vmem:[#allocation5 + $0x40] sm:$0xff] %v862
    %895 = vst [vmem:[#allocation5 + $0x48] sm:$0xff] %v863
    %896 = vst [vmem:[#allocation5 + $0x50] sm:$0xff] %v864
    %897 = vst [vmem:[#allocation5 + $0x58] sm:$0xff] %v865
    %898 = vst [vmem:[#allocation5 + $0x60] sm:$0xff] %v866
    %899 = vst [vmem:[#allocation5 + $0x68] sm:$0xff] %v867
    %900 = vst [vmem:[#allocation5 + $0x70] sm:$0xff] %v868
    %901 = vst [vmem:[#allocation5 + $0x78] sm:$0xff] %v869
    %902 = vst [vmem:[#allocation5 + $0x80] sm:$0xff] %v870
    %903 = vst [vmem:[#allocation5 + $0x88] sm:$0xff] %v871
    %904 = vst [vmem:[#allocation5 + $0x90] sm:$0xff] %v872
    %905 = vst [vmem:[#allocation5 + $0x98] sm:$0xff] %v873
    %906 = vst [vmem:[#allocation5 + $0xa0] sm:$0xff] %v874
    %907 = vst [vmem:[#allocation5 + $0xa8] sm:$0xff] %v875
    %908 = vst [vmem:[#allocation5 + $0xb0] sm:$0xff] %v876
    %909 = vst [vmem:[#allocation5 + $0xb8] sm:$0xff] %v877
    %910 = vst [vmem:[#allocation5 + $0xc0] sm:$0xff] %v878
    %911 = vst [vmem:[#allocation5 + $0xc8] sm:$0xff] %v879
    %912 = vst [vmem:[#allocation5 + $0xd0] sm:$0xff] %v880
    %913 = vst [vmem:[#allocation5 + $0xd8] sm:$0xff] %v881
    %914 = vst [vmem:[#allocation5 + $0xe0] sm:$0xff] %v882
    %915 = vst [vmem:[#allocation5 + $0xe8] sm:$0xff] %v883
    %916 = vst [vmem:[#allocation5 + $0xf0] sm:$0xff] %v884
    %917 = vst [vmem:[#allocation5 + $0xf8] sm:$0xff] %v885
    // Predicated region
    $region26: #{tpu_custom_call.1} parent=1 // pred_check
      _
    $region27: #{tpu_custom_call.1} parent=1 // pred_check_branch
      %919 = sbr.rel (0) target = $region29
    $region28: #{tpu_custom_call.1} parent=1 // pred_region
      %921 = vsyncadd [#allocation4], 0
      %s922 = sshll.u32 [#allocation5], 4
      %s923 = int_to_ptr.vmem [resolvable:$true] %s922
      %s924 = sshll.u32 %s5, 4
      %s925 = int_to_ptr.hbm [resolvable:$true] %s924
      %930 = dma.vmem_to_hbm [thread:$0]  %s923, 4096, %s925, [#allocation4], 128, 128, 8
    $region29: #{tpu_custom_call.1} parent=1 // pred_fallthru
      _
    // Predicated region
    $region30: #{tpu_custom_call.1} parent=1 // pred_check
      _
    $region31: #{tpu_custom_call.1} parent=1 // pred_check_branch
      %932 = sbr.rel (0) target = $region33
    $region32: #{tpu_custom_call.1} parent=1 // pred_region
      %934 = dma.done [#allocation4], 4096
    $region33: #{tpu_custom_call.1} parent=1 // pred_fallthru
      _
    %935 = vsyncpa [#allocation3], 1
    %936 = vsyncpa [#allocation4], 1

</llo_original>
